<compile_context>
chip_gen: v5e
topology: v5e:2x2
jax: 0.10.0
libtpu: 0.0.40
codegen_flags: <defaults>
</compile_context>

<pallas_src>
import jax
import jax.numpy as jnp
from jax import lax
from jax.experimental import pallas as pl
from jax.experimental.pallas import tpu as pltpu


TOP_N = 5
OUT_PAD = 128  # lane-dense output width (sliced back to TOP_N in the wrapper)


def _exploratory_kernel(q_ref, ctx_ref, csq_ref, w_ref, b_ref, dist_ref, idx_ref):
    # q_ref:    (Bt, Q, D)        ctx_ref: (Bt, C, D)
    # csq_ref:  (Bt, 1, C)        precomputed ||ctx||^2 (hoisted to wrapper)
    # w_ref:    (D, D)            nn.Linear weight, (out, in) layout
    # b_ref:    (1, D)
    # dist_ref: (Bt, Q, OUT_PAD)  f32
    # idx_ref:  (Bt, Q, OUT_PAD)  i32
    Bt, Q, D = q_ref.shape
    C = ctx_ref.shape[1]

    w = w_ref[...]          # (D, D)
    b = b_ref[...]          # (1, D)

    # --- Linear projection: y = x @ W.T + b -------------------------------
    # Fold (Bt, Q) into the M dimension and contract last dims directly
    # (dimension_numbers (((1,),(1,)),((),())) == x @ W.T with no relayout).
    q2 = q_ref[...].reshape(Bt * Q, D)
    qp2 = lax.dot_general(q2, w, (((1,), (1,)), ((), ())),
                          preferred_element_type=jnp.float32) + b     # (Bt*Q, D)
    qp = qp2.reshape(Bt, Q, D)

    # --- squared pairwise L2: ||a-c||^2 = ||a||^2 + ||c||^2 - 2 a.c --------
    q_sq = jnp.sum(qp * qp, axis=-1, keepdims=True)                    # (Bt, Q, 1)
    cross = jnp.einsum("bqd,bcd->bqc", qp, ctx_ref[...],
                       preferred_element_type=jnp.float32)             # (Bt, Q, C)
    d2 = q_sq + csq_ref[...] - 2.0 * cross                             # (Bt, Q, C)

    # --- iterative smallest-k on squared distances -------------------------
    col_ids = lax.broadcasted_iota(jnp.int32, (Bt, Q, C), 2)
    lane = lax.broadcasted_iota(jnp.int32, (Bt, Q, OUT_PAD), 2)
    dist_out = jnp.zeros((Bt, Q, OUT_PAD), jnp.float32)
    idx_out = jnp.zeros((Bt, Q, OUT_PAD), jnp.int32)

    work = d2
    for k in range(TOP_N):
        m = jnp.min(work, axis=-1, keepdims=True)                      # (Bt, Q, 1)
        # index of first occurrence of the current minimum
        cand = jnp.where(work == m, col_ids, jnp.int32(C))
        amin = jnp.min(cand, axis=-1, keepdims=True)                   # (Bt, Q, 1)
        # sqrt / clamp only on the selected values (monotone => same order)
        dk = jnp.sqrt(jnp.maximum(m, 0.0))
        sel = lane == k
        dist_out = jnp.where(sel, dk, dist_out)
        idx_out = jnp.where(sel, amin, idx_out)
        # exclude the selected element for the next round
        work = jnp.where(col_ids == amin, jnp.float32(jnp.inf), work)

    dist_ref[...] = dist_out
    idx_ref[...] = idx_out


def _choose_batch_tile(B, Q, C, D, budget_bytes=4 << 20):
    """Largest divisor of B whose double-buffered f32 working set fits budget."""
    per_b = 4 * 2 * (Q * D + C * D + C + 2 * Q * OUT_PAD) + 4 * Q * C
    bt = 1
    for cand in range(1, B + 1):
        if B % cand == 0 and cand * per_b <= budget_bytes:
            bt = cand
    return bt


def exploratory_mechanism(query, context, weight, bias, *, batch_tile=None):
    """query: (B,Q,D), context: (B,C,D), weight: (D,D) (out,in), bias: (D,)."""
    B, Q, D = query.shape
    _, C, _ = context.shape
    if batch_tile is None:
        batch_tile = _choose_batch_tile(B, Q, C, D)
    assert B % batch_tile == 0, "batch_tile must divide B"

    bias2d = bias.reshape(1, D)
    # Hoisted context squared norms: (B, 1, C). Negligible HBM traffic, removes
    # a per-step VPU reduction + cross-lane transpose from the kernel.
    c_sq = jnp.sum(context * context, axis=-1)[:, None, :]

    grid = (B // batch_tile,)
    dist_pad, idx_pad = pl.pallas_call(
        _exploratory_kernel,
        out_shape=(
            jax.ShapeDtypeStruct((B, Q, OUT_PAD), jnp.float32),
            jax.ShapeDtypeStruct((B, Q, OUT_PAD), jnp.int32),
        ),
        grid_spec=pltpu.PrefetchScalarGridSpec(
            num_scalar_prefetch=0,
            grid=grid,
            in_specs=[
                pl.BlockSpec((batch_tile, Q, D), lambda i: (i, 0, 0)),
                pl.BlockSpec((batch_tile, C, D), lambda i: (i, 0, 0)),
                pl.BlockSpec((batch_tile, 1, C), lambda i: (i, 0, 0)),
                pl.BlockSpec((D, D), lambda i: (0, 0)),   # grid-invariant weight
                pl.BlockSpec((1, D), lambda i: (0, 0)),   # grid-invariant bias
            ],
            out_specs=[
                pl.BlockSpec((batch_tile, Q, OUT_PAD), lambda i: (i, 0, 0)),
                pl.BlockSpec((batch_tile, Q, OUT_PAD), lambda i: (i, 0, 0)),
            ],
        ),
        compiler_params=pltpu.CompilerParams(
            dimension_semantics=("parallel",)),
    )(query, context, c_sq, weight, bias2d)

    return dist_pad[:, :, :TOP_N], idx_pad[:, :, :TOP_N]


def _reference(query, context, weight, bias):
    qp = jnp.einsum("bqd,ed->bqe", query, weight) + bias
    diff = qp[:, :, None, :] - context[:, None, :, :]
    dist = jnp.sqrt(jnp.sum(diff * diff, axis=-1))
    vals, idxs = lax.top_k(-dist, TOP_N)
    return -vals, idxs


if __name__ == "__main__":
    B, Q, C, D = 2, 8, 16, 32
    key = jax.random.PRNGKey(0)
    k1, k2, k3, k4 = jax.random.split(key, 4)

    query = jax.random.normal(k1, (B, Q, D), dtype=jnp.float32)
    context = jax.random.normal(k2, (B, C, D), dtype=jnp.float32)
    # deterministic "Linear" params (uniform ~ nn.Linear default scale)
    bound = 1.0 / (D ** 0.5)
    weight = jax.random.uniform(k3, (D, D), minval=-bound, maxval=bound,
                                dtype=jnp.float32)
    bias = jax.random.uniform(k4, (D,), minval=-bound, maxval=bound,
                              dtype=jnp.float32)

    top_d, top_i = exploratory_mechanism(query, context, weight, bias)
    jax.block_until_ready((top_d, top_i))

    ref_d, ref_i = _reference(query, context, weight, bias)
    assert jnp.allclose(top_d, ref_d, atol=1e-4, rtol=1e-4), "distance mismatch"
    assert jnp.array_equal(top_i, ref_i), "index mismatch"

    print("KERNEL_OK")
</pallas_src>

<mosaic_0001>
module attributes {stable_mosaic.version = 11 : i64} {
  func.func @_exploratory_kernel(%arg0: i32, %arg1: memref<2x8x32xf32, #tpu.memory_space<vmem>>, %arg2: memref<2x16x32xf32, #tpu.memory_space<vmem>>, %arg3: memref<2x1x16xf32, #tpu.memory_space<vmem>>, %arg4: memref<32x32xf32, #tpu.memory_space<vmem>>, %arg5: memref<1x32xf32, #tpu.memory_space<vmem>>, %arg6: memref<2x8x128xf32, #tpu.memory_space<vmem>>, %arg7: memref<2x8x128xi32, #tpu.memory_space<vmem>>) attributes {dimension_semantics = [#tpu.dimension_semantics<parallel>], iteration_bounds = array<i64: 1>, scalar_prefetch = 0 : i64, scratch_operands = 0 : i64, tpu.core_type = #tpu.core_type<tc>, window_params = [{transform_indices = @transform_0, window_bounds = array<i64: 2, 8, 32>}, {transform_indices = @transform_1, window_bounds = array<i64: 2, 16, 32>}, {transform_indices = @transform_2, window_bounds = array<i64: 2, 1, 16>}, {pipeline_mode = #tpu.pipeline_mode<synchronous>, transform_indices = @transform_3, window_bounds = array<i64: 32, 32>}, {pipeline_mode = #tpu.pipeline_mode<synchronous>, transform_indices = @transform_4, window_bounds = array<i64: 1, 32>}, {transform_indices = @transform_5, window_bounds = array<i64: 2, 8, 128>}, {transform_indices = @transform_6, window_bounds = array<i64: 2, 8, 128>}]} {
    %c0 = arith.constant 0 : index
    %c0_0 = arith.constant 0 : index
    %0 = vector.load %arg4[%c0, %c0_0] : memref<32x32xf32, #tpu.memory_space<vmem>>, vector<32x32xf32>
    %c0_1 = arith.constant 0 : index
    %c0_2 = arith.constant 0 : index
    %1 = vector.load %arg5[%c0_1, %c0_2] : memref<1x32xf32, #tpu.memory_space<vmem>>, vector<1x32xf32>
    %c0_3 = arith.constant 0 : index
    %c0_4 = arith.constant 0 : index
    %c0_5 = arith.constant 0 : index
    %2 = vector.load %arg1[%c0_3, %c0_4, %c0_5] : memref<2x8x32xf32, #tpu.memory_space<vmem>>, vector<2x8x32xf32>
    %3 = vector.shape_cast %2 : vector<2x8x32xf32> to vector<16x32xf32>
    %cst = arith.constant dense<0.000000e+00> : vector<16x32xf32>
    %4 = tpu.matmul %3, %0, %cst {dimension_numbers = #tpu.dot_dimension_numbers<[1], [1], [0], [0], [0, 0, 1, 0], [], []>} : vector<16x32xf32>, vector<32x32xf32>, vector<16x32xf32> -> vector<16x32xf32>
    %5 = vector.broadcast %1 : vector<1x32xf32> to vector<16x32xf32>
    %6 = arith.addf %4, %5 : vector<16x32xf32>
    %7 = vector.shape_cast %6 : vector<16x32xf32> to vector<2x8x32xf32>
    %8 = arith.mulf %7, %7 : vector<2x8x32xf32>
    %cst_6 = arith.constant dense<0.000000e+00> : vector<2x8xf32>
    %9 = vector.multi_reduction <add>, %8, %cst_6 [2] : vector<2x8x32xf32> to vector<2x8xf32>
    %10 = vector.shape_cast %9 : vector<2x8xf32> to vector<2x8x1xf32>
    %c0_7 = arith.constant 0 : index
    %c0_8 = arith.constant 0 : index
    %c0_9 = arith.constant 0 : index
    %11 = vector.load %arg2[%c0_7, %c0_8, %c0_9] : memref<2x16x32xf32, #tpu.memory_space<vmem>>, vector<2x16x32xf32>
    "tpu.trace_start"() <{level = 10 : i32, message = "bqd,bcd->bqc"}> : () -> ()
    %cst_10 = arith.constant dense<0.000000e+00> : vector<2x8x16xf32>
    %12 = tpu.matmul %7, %11, %cst_10 {dimension_numbers = #tpu.dot_dimension_numbers<[2], [2], [1], [1], [0, 0, 0, 1, 1, 1], [0], [0]>} : vector<2x8x32xf32>, vector<2x16x32xf32>, vector<2x8x16xf32> -> vector<2x8x16xf32>
    "tpu.trace_stop"() : () -> ()
    %c0_11 = arith.constant 0 : index
    %c0_12 = arith.constant 0 : index
    %c0_13 = arith.constant 0 : index
    %13 = vector.load %arg3[%c0_11, %c0_12, %c0_13] : memref<2x1x16xf32, #tpu.memory_space<vmem>>, vector<2x1x16xf32>
    %14 = vector.broadcast %10 : vector<2x8x1xf32> to vector<2x8x16xf32>
    %15 = vector.broadcast %13 : vector<2x1x16xf32> to vector<2x8x16xf32>
    %16 = arith.addf %14, %15 : vector<2x8x16xf32>
    %cst_14 = arith.constant 2.000000e+00 : f32
    %17 = vector.broadcast %cst_14 : f32 to vector<2x8x16xf32>
    %18 = arith.mulf %17, %12 : vector<2x8x16xf32>
    %19 = arith.subf %16, %18 : vector<2x8x16xf32>
    %20 = tpu.iota {dimensions = array<i32: 2>} : vector<2x8x16xi32>
    %21 = tpu.iota {dimensions = array<i32: 2>} : vector<2x8x128xi32>
    %cst_15 = arith.constant 0.000000e+00 : f32
    %22 = vector.broadcast %cst_15 : f32 to vector<2x8x128xf32>
    %c0_i32 = arith.constant 0 : i32
    %23 = vector.broadcast %c0_i32 : i32 to vector<2x8x128xi32>
    %cst_16 = arith.constant dense<0x7F800000> : vector<2x8xf32>
    %24 = vector.multi_reduction <minimumf>, %19, %cst_16 [2] : vector<2x8x16xf32> to vector<2x8xf32>
    %25 = vector.shape_cast %24 : vector<2x8xf32> to vector<2x8x1xf32>
    %26 = vector.broadcast %25 : vector<2x8x1xf32> to vector<2x8x16xf32>
    %27 = arith.cmpf oeq, %19, %26 : vector<2x8x16xf32>
    %c16_i32 = arith.constant 16 : i32
    %28 = vector.broadcast %c16_i32 : i32 to vector<2x8x16xi32>
    %29 = arith.select %27, %20, %28 : vector<2x8x16xi1>, vector<2x8x16xi32>
    %cst_17 = arith.constant dense<2147483647> : vector<2x8xi32>
    %30 = vector.multi_reduction <minsi>, %29, %cst_17 [2] : vector<2x8x16xi32> to vector<2x8xi32>
    %31 = vector.shape_cast %30 : vector<2x8xi32> to vector<2x8x1xi32>
    %cst_18 = arith.constant 0.000000e+00 : f32
    %32 = vector.broadcast %cst_18 : f32 to vector<2x8x1xf32>
    %33 = arith.maximumf %25, %32 : vector<2x8x1xf32>
    %34 = math.sqrt %33 : vector<2x8x1xf32>
    %c0_i32_19 = arith.constant 0 : i32
    %35 = vector.broadcast %c0_i32_19 : i32 to vector<2x8x128xi32>
    %36 = arith.cmpi eq, %21, %35 : vector<2x8x128xi32>
    %37 = vector.shape_cast %34 : vector<2x8x1xf32> to vector<2x8x1xf32>
    %38 = vector.broadcast %37 : vector<2x8x1xf32> to vector<2x8x128xf32>
    %39 = arith.select %36, %38, %22 : vector<2x8x128xi1>, vector<2x8x128xf32>
    %40 = vector.shape_cast %31 : vector<2x8x1xi32> to vector<2x8x1xi32>
    %41 = vector.broadcast %40 : vector<2x8x1xi32> to vector<2x8x128xi32>
    %42 = arith.select %36, %41, %23 : vector<2x8x128xi1>, vector<2x8x128xi32>
    %43 = vector.broadcast %31 : vector<2x8x1xi32> to vector<2x8x16xi32>
    %44 = arith.cmpi eq, %20, %43 : vector<2x8x16xi32>
    %cst_20 = arith.constant 0x7F800000 : f32
    %45 = vector.broadcast %cst_20 : f32 to vector<2x8x16xf32>
    %46 = arith.select %44, %45, %19 : vector<2x8x16xi1>, vector<2x8x16xf32>
    %cst_21 = arith.constant dense<0x7F800000> : vector<2x8xf32>
    %47 = vector.multi_reduction <minimumf>, %46, %cst_21 [2] : vector<2x8x16xf32> to vector<2x8xf32>
    %48 = vector.shape_cast %47 : vector<2x8xf32> to vector<2x8x1xf32>
    %49 = vector.broadcast %48 : vector<2x8x1xf32> to vector<2x8x16xf32>
    %50 = arith.cmpf oeq, %46, %49 : vector<2x8x16xf32>
    %c16_i32_22 = arith.constant 16 : i32
    %51 = vector.broadcast %c16_i32_22 : i32 to vector<2x8x16xi32>
    %52 = arith.select %50, %20, %51 : vector<2x8x16xi1>, vector<2x8x16xi32>
    %cst_23 = arith.constant dense<2147483647> : vector<2x8xi32>
    %53 = vector.multi_reduction <minsi>, %52, %cst_23 [2] : vector<2x8x16xi32> to vector<2x8xi32>
    %54 = vector.shape_cast %53 : vector<2x8xi32> to vector<2x8x1xi32>
    %cst_24 = arith.constant 0.000000e+00 : f32
    %55 = vector.broadcast %cst_24 : f32 to vector<2x8x1xf32>
    %56 = arith.maximumf %48, %55 : vector<2x8x1xf32>
    %57 = math.sqrt %56 : vector<2x8x1xf32>
    %c1_i32 = arith.constant 1 : i32
    %58 = vector.broadcast %c1_i32 : i32 to vector<2x8x128xi32>
    %59 = arith.cmpi eq, %21, %58 : vector<2x8x128xi32>
    %60 = vector.shape_cast %57 : vector<2x8x1xf32> to vector<2x8x1xf32>
    %61 = vector.broadcast %60 : vector<2x8x1xf32> to vector<2x8x128xf32>
    %62 = arith.select %59, %61, %39 : vector<2x8x128xi1>, vector<2x8x128xf32>
    %63 = vector.shape_cast %54 : vector<2x8x1xi32> to vector<2x8x1xi32>
    %64 = vector.broadcast %63 : vector<2x8x1xi32> to vector<2x8x128xi32>
    %65 = arith.select %59, %64, %42 : vector<2x8x128xi1>, vector<2x8x128xi32>
    %66 = vector.broadcast %54 : vector<2x8x1xi32> to vector<2x8x16xi32>
    %67 = arith.cmpi eq, %20, %66 : vector<2x8x16xi32>
    %cst_25 = arith.constant 0x7F800000 : f32
    %68 = vector.broadcast %cst_25 : f32 to vector<2x8x16xf32>
    %69 = arith.select %67, %68, %46 : vector<2x8x16xi1>, vector<2x8x16xf32>
    %cst_26 = arith.constant dense<0x7F800000> : vector<2x8xf32>
    %70 = vector.multi_reduction <minimumf>, %69, %cst_26 [2] : vector<2x8x16xf32> to vector<2x8xf32>
    %71 = vector.shape_cast %70 : vector<2x8xf32> to vector<2x8x1xf32>
    %72 = vector.broadcast %71 : vector<2x8x1xf32> to vector<2x8x16xf32>
    %73 = arith.cmpf oeq, %69, %72 : vector<2x8x16xf32>
    %c16_i32_27 = arith.constant 16 : i32
    %74 = vector.broadcast %c16_i32_27 : i32 to vector<2x8x16xi32>
    %75 = arith.select %73, %20, %74 : vector<2x8x16xi1>, vector<2x8x16xi32>
    %cst_28 = arith.constant dense<2147483647> : vector<2x8xi32>
    %76 = vector.multi_reduction <minsi>, %75, %cst_28 [2] : vector<2x8x16xi32> to vector<2x8xi32>
    %77 = vector.shape_cast %76 : vector<2x8xi32> to vector<2x8x1xi32>
    %cst_29 = arith.constant 0.000000e+00 : f32
    %78 = vector.broadcast %cst_29 : f32 to vector<2x8x1xf32>
    %79 = arith.maximumf %71, %78 : vector<2x8x1xf32>
    %80 = math.sqrt %79 : vector<2x8x1xf32>
    %c2_i32 = arith.constant 2 : i32
    %81 = vector.broadcast %c2_i32 : i32 to vector<2x8x128xi32>
    %82 = arith.cmpi eq, %21, %81 : vector<2x8x128xi32>
    %83 = vector.shape_cast %80 : vector<2x8x1xf32> to vector<2x8x1xf32>
    %84 = vector.broadcast %83 : vector<2x8x1xf32> to vector<2x8x128xf32>
    %85 = arith.select %82, %84, %62 : vector<2x8x128xi1>, vector<2x8x128xf32>
    %86 = vector.shape_cast %77 : vector<2x8x1xi32> to vector<2x8x1xi32>
    %87 = vector.broadcast %86 : vector<2x8x1xi32> to vector<2x8x128xi32>
    %88 = arith.select %82, %87, %65 : vector<2x8x128xi1>, vector<2x8x128xi32>
    %89 = vector.broadcast %77 : vector<2x8x1xi32> to vector<2x8x16xi32>
    %90 = arith.cmpi eq, %20, %89 : vector<2x8x16xi32>
    %cst_30 = arith.constant 0x7F800000 : f32
    %91 = vector.broadcast %cst_30 : f32 to vector<2x8x16xf32>
    %92 = arith.select %90, %91, %69 : vector<2x8x16xi1>, vector<2x8x16xf32>
    %cst_31 = arith.constant dense<0x7F800000> : vector<2x8xf32>
    %93 = vector.multi_reduction <minimumf>, %92, %cst_31 [2] : vector<2x8x16xf32> to vector<2x8xf32>
    %94 = vector.shape_cast %93 : vector<2x8xf32> to vector<2x8x1xf32>
    %95 = vector.broadcast %94 : vector<2x8x1xf32> to vector<2x8x16xf32>
    %96 = arith.cmpf oeq, %92, %95 : vector<2x8x16xf32>
    %c16_i32_32 = arith.constant 16 : i32
    %97 = vector.broadcast %c16_i32_32 : i32 to vector<2x8x16xi32>
    %98 = arith.select %96, %20, %97 : vector<2x8x16xi1>, vector<2x8x16xi32>
    %cst_33 = arith.constant dense<2147483647> : vector<2x8xi32>
    %99 = vector.multi_reduction <minsi>, %98, %cst_33 [2] : vector<2x8x16xi32> to vector<2x8xi32>
    %100 = vector.shape_cast %99 : vector<2x8xi32> to vector<2x8x1xi32>
    %cst_34 = arith.constant 0.000000e+00 : f32
    %101 = vector.broadcast %cst_34 : f32 to vector<2x8x1xf32>
    %102 = arith.maximumf %94, %101 : vector<2x8x1xf32>
    %103 = math.sqrt %102 : vector<2x8x1xf32>
    %c3_i32 = arith.constant 3 : i32
    %104 = vector.broadcast %c3_i32 : i32 to vector<2x8x128xi32>
    %105 = arith.cmpi eq, %21, %104 : vector<2x8x128xi32>
    %106 = vector.shape_cast %103 : vector<2x8x1xf32> to vector<2x8x1xf32>
    %107 = vector.broadcast %106 : vector<2x8x1xf32> to vector<2x8x128xf32>
    %108 = arith.select %105, %107, %85 : vector<2x8x128xi1>, vector<2x8x128xf32>
    %109 = vector.shape_cast %100 : vector<2x8x1xi32> to vector<2x8x1xi32>
    %110 = vector.broadcast %109 : vector<2x8x1xi32> to vector<2x8x128xi32>
    %111 = arith.select %105, %110, %88 : vector<2x8x128xi1>, vector<2x8x128xi32>
    %112 = vector.broadcast %100 : vector<2x8x1xi32> to vector<2x8x16xi32>
    %113 = arith.cmpi eq, %20, %112 : vector<2x8x16xi32>
    %cst_35 = arith.constant 0x7F800000 : f32
    %114 = vector.broadcast %cst_35 : f32 to vector<2x8x16xf32>
    %115 = arith.select %113, %114, %92 : vector<2x8x16xi1>, vector<2x8x16xf32>
    %cst_36 = arith.constant dense<0x7F800000> : vector<2x8xf32>
    %116 = vector.multi_reduction <minimumf>, %115, %cst_36 [2] : vector<2x8x16xf32> to vector<2x8xf32>
    %117 = vector.shape_cast %116 : vector<2x8xf32> to vector<2x8x1xf32>
    %118 = vector.broadcast %117 : vector<2x8x1xf32> to vector<2x8x16xf32>
    %119 = arith.cmpf oeq, %115, %118 : vector<2x8x16xf32>
    %c16_i32_37 = arith.constant 16 : i32
    %120 = vector.broadcast %c16_i32_37 : i32 to vector<2x8x16xi32>
    %121 = arith.select %119, %20, %120 : vector<2x8x16xi1>, vector<2x8x16xi32>
    %cst_38 = arith.constant dense<2147483647> : vector<2x8xi32>
    %122 = vector.multi_reduction <minsi>, %121, %cst_38 [2] : vector<2x8x16xi32> to vector<2x8xi32>
    %123 = vector.shape_cast %122 : vector<2x8xi32> to vector<2x8x1xi32>
    %cst_39 = arith.constant 0.000000e+00 : f32
    %124 = vector.broadcast %cst_39 : f32 to vector<2x8x1xf32>
    %125 = arith.maximumf %117, %124 : vector<2x8x1xf32>
    %126 = math.sqrt %125 : vector<2x8x1xf32>
    %c4_i32 = arith.constant 4 : i32
    %127 = vector.broadcast %c4_i32 : i32 to vector<2x8x128xi32>
    %128 = arith.cmpi eq, %21, %127 : vector<2x8x128xi32>
    %129 = vector.shape_cast %126 : vector<2x8x1xf32> to vector<2x8x1xf32>
    %130 = vector.broadcast %129 : vector<2x8x1xf32> to vector<2x8x128xf32>
    %131 = arith.select %128, %130, %108 : vector<2x8x128xi1>, vector<2x8x128xf32>
    %132 = vector.shape_cast %123 : vector<2x8x1xi32> to vector<2x8x1xi32>
    %133 = vector.broadcast %132 : vector<2x8x1xi32> to vector<2x8x128xi32>
    %134 = arith.select %128, %133, %111 : vector<2x8x128xi1>, vector<2x8x128xi32>
    %c0_40 = arith.constant 0 : index
    %c0_41 = arith.constant 0 : index
    %c0_42 = arith.constant 0 : index
    %135 = vector.load %arg6[%c0_40, %c0_41, %c0_42] : memref<2x8x128xf32, #tpu.memory_space<vmem>>, vector<2x8x128xf32>
    tpu.vector_store %arg6[%c0_40, %c0_41, %c0_42], %131 {strides = array<i32>} : memref<2x8x128xf32, #tpu.memory_space<vmem>>, vector<2x8x128xf32>,
    %c0_43 = arith.constant 0 : index
    %c0_44 = arith.constant 0 : index
    %c0_45 = arith.constant 0 : index
    %136 = vector.load %arg7[%c0_43, %c0_44, %c0_45] : memref<2x8x128xi32, #tpu.memory_space<vmem>>, vector<2x8x128xi32>
    tpu.vector_store %arg7[%c0_43, %c0_44, %c0_45], %134 {strides = array<i32>} : memref<2x8x128xi32, #tpu.memory_space<vmem>>, vector<2x8x128xi32>,
    return
  }
  func.func @transform_0(%arg0: i32) -> (i32, i32, i32) {
    %c0_i32 = arith.constant 0 : i32
    %c0_i32_0 = arith.constant 0 : i32
    %c0_i32_1 = arith.constant 0 : i32
    return %arg0, %c0_i32, %c0_i32_0 : i32, i32, i32
  }
  func.func @transform_1(%arg0: i32) -> (i32, i32, i32) {
    %c0_i32 = arith.constant 0 : i32
    %c0_i32_0 = arith.constant 0 : i32
    %c0_i32_1 = arith.constant 0 : i32
    return %arg0, %c0_i32, %c0_i32_0 : i32, i32, i32
  }
  func.func @transform_2(%arg0: i32) -> (i32, i32, i32) {
    %c0_i32 = arith.constant 0 : i32
    %c0_i32_0 = arith.constant 0 : i32
    %c0_i32_1 = arith.constant 0 : i32
    return %arg0, %c0_i32, %c0_i32_0 : i32, i32, i32
  }
  func.func @transform_3(%arg0: i32) -> (i32, i32) {
    %c0_i32 = arith.constant 0 : i32
    %c0_i32_0 = arith.constant 0 : i32
    %c0_i32_1 = arith.constant 0 : i32
    return %c0_i32, %c0_i32_0 : i32, i32
  }
  func.func @transform_4(%arg0: i32) -> (i32, i32) {
    %c0_i32 = arith.constant 0 : i32
    %c0_i32_0 = arith.constant 0 : i32
    %c0_i32_1 = arith.constant 0 : i32
    return %c0_i32, %c0_i32_0 : i32, i32
  }
  func.func @transform_5(%arg0: i32) -> (i32, i32, i32) {
    %c0_i32 = arith.constant 0 : i32
    %c0_i32_0 = arith.constant 0 : i32
    %c0_i32_1 = arith.constant 0 : i32
    return %arg0, %c0_i32, %c0_i32_0 : i32, i32, i32
  }
  func.func @transform_6(%arg0: i32) -> (i32, i32, i32) {
    %c0_i32 = arith.constant 0 : i32
    %c0_i32_0 = arith.constant 0 : i32
    %c0_i32_1 = arith.constant 0 : i32
    return %arg0, %c0_i32, %c0_i32_0 : i32, i32, i32
  }
}

</mosaic_0001>

<llo_original>
// kernel: tpu_custom_call.1
$region0: #{tpu_custom_call.1}
  #allocation0 [shape = 'u32[]', space=smem, size = 0x4, offset = 0x4, fixed_abs, tag = 'smem constant byte address 0x4 - core index']
  #allocation1 [shape = 'u32[72,128]{1,0:T(1,128)}', space=vmem, size = 0x9000, scoped, tag = 'internal scratch']
  %s0 = inlined_call_operand.hbm [shape: f32[2,8,32], index: 0, kind: input, shape index: {}]
  %s1 = inlined_call_operand.hbm [shape: f32[2,16,32], index: 1, kind: input, shape index: {}]
  %s2 = inlined_call_operand.hbm [shape: f32[2,1,16], index: 2, kind: input, shape index: {}]
  %s3 = inlined_call_operand.hbm [shape: f32[32,32], index: 3, kind: input, shape index: {}]
  %s4 = inlined_call_operand.vmem [shape: f32[1,32], index: 4, kind: input, shape index: {}]
  %s5 = inlined_call_operand.hbm [shape: f32[2,8,128], index: 5, kind: output, shape index: {0}]
  %s6 = inlined_call_operand.hbm [shape: s32[2,8,128], index: 6, kind: output, shape index: {1}]
  %7 = xla_tuple %s5, %s6
  %s8 = sld [smem:[#allocation0]]
  $region54: #{tpu_custom_call.1} parent=0
    _
  %s10 = ssub.s32 1, %s8
  %s11 = scalar_select 0, %s10, %s8
  $region1: #{tpu_custom_call.1} parent=0
    #allocation2 [shape = 'u8[8192]{0}', space=vmem, size = 0x2000, scoped, tag = 'input window, operand 0, single buffered']
    #allocation3 [shape = 's32[1]{0}', space=sflag, size = 0x4, scoped, tag = 'scoped memory for tpu_custom_call.1']
    #allocation4 [shape = 's32[1]{0}', space=sflag, size = 0x4, scoped, tag = 'scoped memory for tpu_custom_call.1']
    #allocation5 [shape = 'u8[16384]{0}', space=vmem, size = 0x4000, scoped, tag = 'input window, operand 1, single buffered']
    #allocation6 [shape = 's32[1]{0}', space=sflag, size = 0x4, scoped, tag = 'scoped memory for tpu_custom_call.1']
    #allocation7 [shape = 'u8[1024]{0}', space=vmem, size = 0x400, scoped, tag = 'input window, operand 2, single buffered']
    #allocation8 [shape = 'u8[16384]{0}', space=vmem, size = 0x4000, scoped, tag = 'input window, operand 3, single buffered']
    #allocation9 [shape = 's32[1]{0}', space=sflag, size = 0x4, scoped, tag = 'scoped memory for tpu_custom_call.1']
    #allocation10 [shape = 'u8[8192]{0}', space=vmem, size = 0x2000, scoped, tag = 'output window, operand 0, single buffered']
    #allocation11 [shape = 'u8[8192]{0}', space=vmem, size = 0x2000, scoped, tag = 'output window, operand 1, single buffered']
    #allocation12 [shape = 's32[1]{0}', space=sflag, size = 0x4, scoped, tag = 'scoped memory for tpu_custom_call.1']
    %12 = vsyncpa [#allocation3], 0
    %13 = vsyncpa [#allocation6], 0
    %14 = vsyncpa [#allocation9], 0
    %15 = vsyncpa [#allocation4], 0
    %16 = vsyncpa [#allocation12], 0
    // Predicated region
    $region2: #{tpu_custom_call.1} parent=1 // pred_check
      _
    $region3: #{tpu_custom_call.1} parent=1 // pred_check_branch
      %18 = sbr.rel (0) target = $region5
    $region4: #{tpu_custom_call.1} parent=1 // pred_region
      %20 = vsyncadd [#allocation3], 0
      %s21 = sshll.u32 %s0, 4
      %s22 = int_to_ptr.hbm [resolvable:$true] %s21
      %s23 = sshll.u32 [#allocation2], 4
      %s24 = int_to_ptr.vmem [resolvable:$true] %s23
      %29 = dma.hbm_to_vmem [thread:$0]  %s22, 256, %s24, [#allocation3], 128, 128, 8
    $region5: #{tpu_custom_call.1} parent=1 // pred_fallthru
      _
    // Predicated region
    $region6: #{tpu_custom_call.1} parent=1 // pred_check
      _
    $region7: #{tpu_custom_call.1} parent=1 // pred_check_branch
      %31 = sbr.rel (0) target = $region9
    $region8: #{tpu_custom_call.1} parent=1 // pred_region
      %33 = vsyncadd [#allocation6], 0
      %s34 = sshll.u32 %s1, 4
      %s35 = int_to_ptr.hbm [resolvable:$true] %s34
      %s36 = sshll.u32 [#allocation5], 4
      %s37 = int_to_ptr.vmem [resolvable:$true] %s36
      %42 = dma.hbm_to_vmem [thread:$0]  %s35, 512, %s37, [#allocation6], 128, 128, 8
    $region9: #{tpu_custom_call.1} parent=1 // pred_fallthru
      _
    // Predicated region
    $region10: #{tpu_custom_call.1} parent=1 // pred_check
      _
    $region11: #{tpu_custom_call.1} parent=1 // pred_check_branch
      %44 = sbr.rel (0) target = $region13
    $region12: #{tpu_custom_call.1} parent=1 // pred_region
      %46 = vsyncadd [#allocation6], 0
      %s47 = sshll.u32 %s2, 4
      %s48 = int_to_ptr.hbm [resolvable:$true] %s47
      %s49 = sshll.u32 [#allocation7], 4
      %s50 = int_to_ptr.vmem [resolvable:$true] %s49
      %55 = dma.hbm_to_vmem [thread:$0]  %s48, 32, %s50, [#allocation6], 16, 16, 1
    $region13: #{tpu_custom_call.1} parent=1 // pred_fallthru
      _
    // Predicated region
    $region14: #{tpu_custom_call.1} parent=1 // pred_check
      _
    $region15: #{tpu_custom_call.1} parent=1 // pred_check_branch
      %57 = sbr.rel (0) target = $region17
    $region16: #{tpu_custom_call.1} parent=1 // pred_region
      %59 = vsyncadd [#allocation9], 0
      %s60 = sshll.u32 %s3, 4
      %s61 = int_to_ptr.hbm [resolvable:$true] %s60
      %s62 = sshll.u32 [#allocation8], 4
      %s63 = int_to_ptr.vmem [resolvable:$true] %s62
      %68 = dma.hbm_to_vmem [thread:$0]  %s61, 512, %s63, [#allocation9], 128, 128, 8
    $region17: #{tpu_custom_call.1} parent=1 // pred_fallthru
      _
    // Predicated region
    $region18: #{tpu_custom_call.1} parent=1 // pred_check
      _
    $region19: #{tpu_custom_call.1} parent=1 // pred_check_branch
      %70 = sbr.rel (0) target = $region21
    $region20: #{tpu_custom_call.1} parent=1 // pred_region
      _
    $region21: #{tpu_custom_call.1} parent=1 // pred_fallthru
      _
    // Predicated region
    $region22: #{tpu_custom_call.1} parent=1 // pred_check
      _
    $region23: #{tpu_custom_call.1} parent=1 // pred_check_branch
      %72 = sbr.rel (0) target = $region25
    $region24: #{tpu_custom_call.1} parent=1 // pred_region
      %74 = dma.done [#allocation3], 256
    $region25: #{tpu_custom_call.1} parent=1 // pred_fallthru
      _
    // Predicated region
    $region26: #{tpu_custom_call.1} parent=1 // pred_check
      _
    $region27: #{tpu_custom_call.1} parent=1 // pred_check_branch
      %76 = sbr.rel (0) target = $region29
    $region28: #{tpu_custom_call.1} parent=1 // pred_region
      %78 = dma.done [#allocation6], 512
    $region29: #{tpu_custom_call.1} parent=1 // pred_fallthru
      _
    // Predicated region
    $region30: #{tpu_custom_call.1} parent=1 // pred_check
      _
    $region31: #{tpu_custom_call.1} parent=1 // pred_check_branch
      %80 = sbr.rel (0) target = $region33
    $region32: #{tpu_custom_call.1} parent=1 // pred_region
      %82 = dma.done [#allocation6], 32
    $region33: #{tpu_custom_call.1} parent=1 // pred_fallthru
      _
    // Predicated region
    $region34: #{tpu_custom_call.1} parent=1 // pred_check
      _
    $region35: #{tpu_custom_call.1} parent=1 // pred_check_branch
      %84 = sbr.rel (0) target = $region37
    $region36: #{tpu_custom_call.1} parent=1 // pred_region
      %86 = dma.done [#allocation9], 512
    $region37: #{tpu_custom_call.1} parent=1 // pred_fallthru
      _
    %v87 = vld [vmem:[#allocation8] sm:$0xff]
    %v88 = vld [vmem:[#allocation8 + $0x8] sm:$0xff]
    %v89 = vld [vmem:[#allocation8 + $0x10] sm:$0xff]
    %v90 = vld [vmem:[#allocation8 + $0x18] sm:$0xff]
    %v91 = vld [vmem:[%s4] sm:$0x1]
    %v92 = vld [vmem:[#allocation2] sm:$0xff]
    %v93 = vld [vmem:[#allocation2 + $0x8] sm:$0xff]
    %v95 = vperm.slane %v91, 0
    %vm97 = vcmask 261120
    %v99 = vsel %vm97, %v92, 0
    %v102 = vsel %vm97, %v93, 0
    %v105 = vsel %vm97, %v87, 0
    %v108 = vsel %vm97, %v88, 0
    %v111 = vsel %vm97, %v89, 0
    %v114 = vsel %vm97, %v90, 0
    %116 = vmatpush.xpose.msra.mxu0 0.0
    %117 = vmatpush.xpose.msra.mxu0 0.0
    %118 = vmatpush.xpose.msra.mxu0 0.0
    %119 = vmatpush.xpose.msra.mxu0 0.0
    %120 = vmatpush.xpose.msra.mxu0 0.0
    %121 = vmatpush.xpose.msra.mxu0 0.0
    %122 = vmatpush.xpose.msra.mxu0 0.0
    %123 = vmatpush.xpose.msra.mxu0 0.0
    %124 = vmatpush.xpose.msra.mxu0 0.0
    %125 = vmatpush.xpose.msra.mxu0 0.0
    %126 = vmatpush.xpose.msra.mxu0 0.0
    %127 = vmatpush.xpose.msra.mxu0 0.0
    %128 = vmatpush.xpose.msra.mxu0 %v114
    %129 = vmatpush.xpose.msra.mxu0 %v111
    %130 = vmatpush.xpose.msra.mxu0 %v108
    %131 = vmatpush.xpose.msra.mxu0 %v105
    %132 = vmatmul.f32.gmra.mxu0 %v99
    %v133 = vpop.f32.mrf.mxu0
    %v134 = vadd.f32 %v95, %v133
    %135 = vmatmul.f32.gmra.mxu0 %v102
    %v136 = vpop.f32.mrf.mxu0
    %v137 = vadd.f32 %v95, %v136
    %138 = vdwg.mxu0
    %v139 = vmul.f32 %v134, %v134
    %v140 = vmul.f32 %v137, %v137
    %v141 = vsel %vm97, %v139, 0.0
    %142 = vadd.xlane.f32.xlu0 %v141
    %v143 = vpop.xlane.xlu0 %142
    %v144 = vsel %vm97, %v140, 0.0
    %145 = vadd.xlane.f32.xlu0 %v144
    %v146 = vpop.xlane.xlu0 %145
    %v147 = vld [vmem:[#allocation5] sm:$0xff]
    %v148 = vld [vmem:[#allocation5 + $0x8] sm:$0xff]
    %v149 = vld [vmem:[#allocation5 + $0x10] sm:$0xff]
    %v150 = vld [vmem:[#allocation5 + $0x18] sm:$0xff]
    %v152 = vsel %vm97, %v134, 0
    %v155 = vsel %vm97, %v147, 0
    %v158 = vsel %vm97, %v148, 0
    %160 = vmatpush.xpose.msra.mxu0 0.0
    %161 = vmatpush.xpose.msra.mxu0 0.0
    %162 = vmatpush.xpose.msra.mxu0 0.0
    %163 = vmatpush.xpose.msra.mxu0 0.0
    %164 = vmatpush.xpose.msra.mxu0 0.0
    %165 = vmatpush.xpose.msra.mxu0 0.0
    %166 = vmatpush.xpose.msra.mxu0 0.0
    %167 = vmatpush.xpose.msra.mxu0 0.0
    %168 = vmatpush.xpose.msra.mxu0 0.0
    %169 = vmatpush.xpose.msra.mxu0 0.0
    %170 = vmatpush.xpose.msra.mxu0 0.0
    %171 = vmatpush.xpose.msra.mxu0 0.0
    %172 = vmatpush.xpose.msra.mxu0 0.0
    %173 = vmatpush.xpose.msra.mxu0 0.0
    %174 = vmatpush.xpose.msra.mxu0 %v158
    %175 = vmatpush.xpose.msra.mxu0 %v155
    %176 = vmatmul.f32.gmra.mxu0 %v152
    %v177 = vpop.f32.mrf.mxu0
    %v178 = vadd.f32 0.0, %v177
    %179 = vdwg.mxu0
    %v181 = vsel %vm97, %v137, 0
    %v184 = vsel %vm97, %v149, 0
    %v187 = vsel %vm97, %v150, 0
    %189 = vmatpush.xpose.msra.mxu0 0.0
    %190 = vmatpush.xpose.msra.mxu0 0.0
    %191 = vmatpush.xpose.msra.mxu0 0.0
    %192 = vmatpush.xpose.msra.mxu0 0.0
    %193 = vmatpush.xpose.msra.mxu0 0.0
    %194 = vmatpush.xpose.msra.mxu0 0.0
    %195 = vmatpush.xpose.msra.mxu0 0.0
    %196 = vmatpush.xpose.msra.mxu0 0.0
    %197 = vmatpush.xpose.msra.mxu0 0.0
    %198 = vmatpush.xpose.msra.mxu0 0.0
    %199 = vmatpush.xpose.msra.mxu0 0.0
    %200 = vmatpush.xpose.msra.mxu0 0.0
    %201 = vmatpush.xpose.msra.mxu0 0.0
    %202 = vmatpush.xpose.msra.mxu0 0.0
    %203 = vmatpush.xpose.msra.mxu0 %v187
    %204 = vmatpush.xpose.msra.mxu0 %v184
    %205 = vmatmul.f32.gmra.mxu0 %v181
    %v206 = vpop.f32.mrf.mxu0
    %v207 = vadd.f32 0.0, %v206
    %208 = vdwg.mxu0
    %v209 = vld [vmem:[#allocation7] sm:$0x1]
    %v210 = vld [vmem:[#allocation7 + $0x1] sm:$0x1]
    %v213 = vperm.slane %v209, 0
    %v214 = vperm.slane %v210, 0
    %v217 = vadd.f32 %v143, %v213
    %v218 = vadd.f32 %v146, %v214
    %v219 = vmul.f32 %v178, 2.0
    %v220 = vmul.f32 %v207, 2.0
    %v221 = vsub.f32 %v217, %v219
    %v222 = vsub.f32 %v218, %v220
    %v223 = vlaneseq
    %v224 = vand.u32 %v223, 127
    %vm225 = vcmask 130048
    %v226 = vsel %vm225, %v221, inf
    %227 = vmin.xlane.f32.xlu0 %v226
    %v228 = vpop.xlane.xlu0 %227
    %v229 = vsel %vm225, %v222, inf
    %230 = vmin.xlane.f32.xlu0 %v229
    %v231 = vpop.xlane.xlu0 %230
    %vm232 = vcmp.eq.f32.partialorder %v221, %v228
    %vm233 = vcmp.eq.f32.partialorder %v222, %v231
    %v234 = vsel %vm232, %v224, 16
    %v235 = vsel %vm233, %v224, 16
    %v236 = vsel %vm225, %v234, 2147483647
    %v237 = vand.u32 %v236, 65535
    %v238 = vshra.s32 %v236, 16
    %v239 = vcvt.s32.f32 %v237
    %v240 = vcvt.s32.f32 %v238
    %241 = vmin.xlane.f32.xlu0 %v240
    %v242 = vpop.xlane.xlu0 %241
    %vm243 = vcmp.eq.f32.partialorder %v240, %v242
    %v244 = vsel %vm243, %v239, inf
    %245 = vmin.xlane.f32.xlu0 %v244
    %v246 = vpop.xlane.xlu0 %245
    %v247 = vcvt.f32.s32 %v246
    %v248 = vcvt.f32.s32 %v242
    %v249 = vshll.u32 %v248, 16
    %v250 = vadd.s32 %v249, %v247
    %v251 = vsel %vm225, %v235, 2147483647
    %v252 = vand.u32 %v251, 65535
    %v253 = vshra.s32 %v251, 16
    %v254 = vcvt.s32.f32 %v252
    %v255 = vcvt.s32.f32 %v253
    %256 = vmin.xlane.f32.xlu0 %v255
    %v257 = vpop.xlane.xlu0 %256
    %vm258 = vcmp.eq.f32.partialorder %v255, %v257
    %v259 = vsel %vm258, %v254, inf
    %260 = vmin.xlane.f32.xlu0 %v259
    %v261 = vpop.xlane.xlu0 %260
    %v262 = vcvt.f32.s32 %v261
    %v263 = vcvt.f32.s32 %v257
    %v264 = vshll.u32 %v263, 16
    %v265 = vadd.s32 %v264, %v262
    %v266 = vmax.f32 %v228, 0.0
    %v267 = vmax.f32 %v231, 0.0
    %v268 = vrsqrt.pop %v266
    %v269 = vmul.f32 %v268, %v266
    %v270 = vmul.f32 %v269, %v268
    %v271 = vmul.f32 0.5, %v270
    %v272 = vsub.f32 1.5, %v271
    %v273 = vmul.f32 %v268, %v272
    %v274 = vmul.f32 %v266, %v273
    %vm275 = vcmp.eq.f32.partialorder %v266, inf
    %v276 = vsel %vm275, %v266, %v274
    %vm277 = vcmp.eq.f32.partialorder %v266, 0.0
    %v278 = vand.u32 %v266, 2147483648
    %v279 = vsel %vm277, %v278, %v276
    %v280 = vrsqrt.pop %v267
    %v281 = vmul.f32 %v280, %v267
    %v282 = vmul.f32 %v281, %v280
    %v283 = vmul.f32 0.5, %v282
    %v284 = vsub.f32 1.5, %v283
    %v285 = vmul.f32 %v280, %v284
    %v286 = vmul.f32 %v267, %v285
    %vm287 = vcmp.eq.f32.partialorder %v267, inf
    %v288 = vsel %vm287, %v267, %v286
    %vm289 = vcmp.eq.f32.partialorder %v267, 0.0
    %v290 = vand.u32 %v267, 2147483648
    %v291 = vsel %vm289, %v290, %v288
    %vm292 = vcmp.eq.s32.totalorder %v224, 0
    %v293 = vsel %vm292, %v279, 0.0
    %v294 = vsel %vm292, %v291, 0.0
    %v295 = vsel %vm292, %v250, 0
    %v296 = vsel %vm292, %v265, 0
    %vm297 = vcmp.eq.s32.totalorder %v224, %v250
    %vm298 = vcmp.eq.s32.totalorder %v224, %v265
    %v299 = vsel %vm297, inf, %v221
    %v300 = vsel %vm298, inf, %v222
    %v301 = vsel %vm225, %v299, inf
    %302 = vmin.xlane.f32.xlu0 %v301
    %v303 = vpop.xlane.xlu0 %302
    %v304 = vsel %vm225, %v300, inf
    %305 = vmin.xlane.f32.xlu0 %v304
    %v306 = vpop.xlane.xlu0 %305
    %vm307 = vcmp.eq.f32.partialorder %v299, %v303
    %vm308 = vcmp.eq.f32.partialorder %v300, %v306
    %v309 = vsel %vm307, %v224, 16
    %v310 = vsel %vm308, %v224, 16
    %v311 = vsel %vm225, %v309, 2147483647
    %v312 = vand.u32 %v311, 65535
    %v313 = vshra.s32 %v311, 16
    %v314 = vcvt.s32.f32 %v312
    %v315 = vcvt.s32.f32 %v313
    %316 = vmin.xlane.f32.xlu0 %v315
    %v317 = vpop.xlane.xlu0 %316
    %vm318 = vcmp.eq.f32.partialorder %v315, %v317
    %v319 = vsel %vm318, %v314, inf
    %320 = vmin.xlane.f32.xlu0 %v319
    %v321 = vpop.xlane.xlu0 %320
    %v322 = vcvt.f32.s32 %v321
    %v323 = vcvt.f32.s32 %v317
    %v324 = vshll.u32 %v323, 16
    %v325 = vadd.s32 %v324, %v322
    %v326 = vsel %vm225, %v310, 2147483647
    %v327 = vand.u32 %v326, 65535
    %v328 = vshra.s32 %v326, 16
    %v329 = vcvt.s32.f32 %v327
    %v330 = vcvt.s32.f32 %v328
    %331 = vmin.xlane.f32.xlu0 %v330
    %v332 = vpop.xlane.xlu0 %331
    %vm333 = vcmp.eq.f32.partialorder %v330, %v332
    %v334 = vsel %vm333, %v329, inf
    %335 = vmin.xlane.f32.xlu0 %v334
    %v336 = vpop.xlane.xlu0 %335
    %v337 = vcvt.f32.s32 %v336
    %v338 = vcvt.f32.s32 %v332
    %v339 = vshll.u32 %v338, 16
    %v340 = vadd.s32 %v339, %v337
    %v341 = vmax.f32 %v303, 0.0
    %v342 = vmax.f32 %v306, 0.0
    %v343 = vrsqrt.pop %v341
    %v344 = vmul.f32 %v343, %v341
    %v345 = vmul.f32 %v344, %v343
    %v346 = vmul.f32 0.5, %v345
    %v347 = vsub.f32 1.5, %v346
    %v348 = vmul.f32 %v343, %v347
    %v349 = vmul.f32 %v341, %v348
    %vm350 = vcmp.eq.f32.partialorder %v341, inf
    %v351 = vsel %vm350, %v341, %v349
    %vm352 = vcmp.eq.f32.partialorder %v341, 0.0
    %v353 = vand.u32 %v341, 2147483648
    %v354 = vsel %vm352, %v353, %v351
    %v355 = vrsqrt.pop %v342
    %v356 = vmul.f32 %v355, %v342
    %v357 = vmul.f32 %v356, %v355
    %v358 = vmul.f32 0.5, %v357
    %v359 = vsub.f32 1.5, %v358
    %v360 = vmul.f32 %v355, %v359
    %v361 = vmul.f32 %v342, %v360
    %vm362 = vcmp.eq.f32.partialorder %v342, inf
    %v363 = vsel %vm362, %v342, %v361
    %vm364 = vcmp.eq.f32.partialorder %v342, 0.0
    %v365 = vand.u32 %v342, 2147483648
    %v366 = vsel %vm364, %v365, %v363
    %vm367 = vcmp.eq.s32.totalorder %v224, 1
    %v368 = vsel %vm367, %v354, %v293
    %v369 = vsel %vm367, %v366, %v294
    %v370 = vsel %vm367, %v325, %v295
    %v371 = vsel %vm367, %v340, %v296
    %vm372 = vcmp.eq.s32.totalorder %v224, %v325
    %vm373 = vcmp.eq.s32.totalorder %v224, %v340
    %v374 = vsel %vm372, inf, %v299
    %v375 = vsel %vm373, inf, %v300
    %v376 = vsel %vm225, %v374, inf
    %377 = vmin.xlane.f32.xlu0 %v376
    %v378 = vpop.xlane.xlu0 %377
    %v379 = vsel %vm225, %v375, inf
    %380 = vmin.xlane.f32.xlu0 %v379
    %v381 = vpop.xlane.xlu0 %380
    %vm382 = vcmp.eq.f32.partialorder %v374, %v378
    %vm383 = vcmp.eq.f32.partialorder %v375, %v381
    %v384 = vsel %vm382, %v224, 16
    %v385 = vsel %vm383, %v224, 16
    %v386 = vsel %vm225, %v384, 2147483647
    %v387 = vand.u32 %v386, 65535
    %v388 = vshra.s32 %v386, 16
    %v389 = vcvt.s32.f32 %v387
    %v390 = vcvt.s32.f32 %v388
    %391 = vmin.xlane.f32.xlu0 %v390
    %v392 = vpop.xlane.xlu0 %391
    %vm393 = vcmp.eq.f32.partialorder %v390, %v392
    %v394 = vsel %vm393, %v389, inf
    %395 = vmin.xlane.f32.xlu0 %v394
    %v396 = vpop.xlane.xlu0 %395
    %v397 = vcvt.f32.s32 %v396
    %v398 = vcvt.f32.s32 %v392
    %v399 = vshll.u32 %v398, 16
    %v400 = vadd.s32 %v399, %v397
    %v401 = vsel %vm225, %v385, 2147483647
    %v402 = vand.u32 %v401, 65535
    %v403 = vshra.s32 %v401, 16
    %v404 = vcvt.s32.f32 %v402
    %v405 = vcvt.s32.f32 %v403
    %406 = vmin.xlane.f32.xlu0 %v405
    %v407 = vpop.xlane.xlu0 %406
    %vm408 = vcmp.eq.f32.partialorder %v405, %v407
    %v409 = vsel %vm408, %v404, inf
    %410 = vmin.xlane.f32.xlu0 %v409
    %v411 = vpop.xlane.xlu0 %410
    %v412 = vcvt.f32.s32 %v411
    %v413 = vcvt.f32.s32 %v407
    %v414 = vshll.u32 %v413, 16
    %v415 = vadd.s32 %v414, %v412
    %v416 = vmax.f32 %v378, 0.0
    %v417 = vmax.f32 %v381, 0.0
    %v418 = vrsqrt.pop %v416
    %v419 = vmul.f32 %v418, %v416
    %v420 = vmul.f32 %v419, %v418
    %v421 = vmul.f32 0.5, %v420
    %v422 = vsub.f32 1.5, %v421
    %v423 = vmul.f32 %v418, %v422
    %v424 = vmul.f32 %v416, %v423
    %vm425 = vcmp.eq.f32.partialorder %v416, inf
    %v426 = vsel %vm425, %v416, %v424
    %vm427 = vcmp.eq.f32.partialorder %v416, 0.0
    %v428 = vand.u32 %v416, 2147483648
    %v429 = vsel %vm427, %v428, %v426
    %v430 = vrsqrt.pop %v417
    %v431 = vmul.f32 %v430, %v417
    %v432 = vmul.f32 %v431, %v430
    %v433 = vmul.f32 0.5, %v432
    %v434 = vsub.f32 1.5, %v433
    %v435 = vmul.f32 %v430, %v434
    %v436 = vmul.f32 %v417, %v435
    %vm437 = vcmp.eq.f32.partialorder %v417, inf
    %v438 = vsel %vm437, %v417, %v436
    %vm439 = vcmp.eq.f32.partialorder %v417, 0.0
    %v440 = vand.u32 %v417, 2147483648
    %v441 = vsel %vm439, %v440, %v438
    %vm442 = vcmp.eq.s32.totalorder %v224, 2
    %v443 = vsel %vm442, %v429, %v368
    %v444 = vsel %vm442, %v441, %v369
    %v445 = vsel %vm442, %v400, %v370
    %v446 = vsel %vm442, %v415, %v371
    %vm447 = vcmp.eq.s32.totalorder %v224, %v400
    %vm448 = vcmp.eq.s32.totalorder %v224, %v415
    %v449 = vsel %vm447, inf, %v374
    %v450 = vsel %vm448, inf, %v375
    %v451 = vsel %vm225, %v449, inf
    %452 = vmin.xlane.f32.xlu0 %v451
    %v453 = vpop.xlane.xlu0 %452
    %v454 = vsel %vm225, %v450, inf
    %455 = vmin.xlane.f32.xlu0 %v454
    %v456 = vpop.xlane.xlu0 %455
    %vm457 = vcmp.eq.f32.partialorder %v449, %v453
    %vm458 = vcmp.eq.f32.partialorder %v450, %v456
    %v459 = vsel %vm457, %v224, 16
    %v460 = vsel %vm458, %v224, 16
    %v461 = vsel %vm225, %v459, 2147483647
    %v462 = vand.u32 %v461, 65535
    %v463 = vshra.s32 %v461, 16
    %v464 = vcvt.s32.f32 %v462
    %v465 = vcvt.s32.f32 %v463
    %466 = vmin.xlane.f32.xlu0 %v465
    %v467 = vpop.xlane.xlu0 %466
    %vm468 = vcmp.eq.f32.partialorder %v465, %v467
    %v469 = vsel %vm468, %v464, inf
    %470 = vmin.xlane.f32.xlu0 %v469
    %v471 = vpop.xlane.xlu0 %470
    %v472 = vcvt.f32.s32 %v471
    %v473 = vcvt.f32.s32 %v467
    %v474 = vshll.u32 %v473, 16
    %v475 = vadd.s32 %v474, %v472
    %v476 = vsel %vm225, %v460, 2147483647
    %v477 = vand.u32 %v476, 65535
    %v478 = vshra.s32 %v476, 16
    %v479 = vcvt.s32.f32 %v477
    %v480 = vcvt.s32.f32 %v478
    %481 = vmin.xlane.f32.xlu0 %v480
    %v482 = vpop.xlane.xlu0 %481
    %vm483 = vcmp.eq.f32.partialorder %v480, %v482
    %v484 = vsel %vm483, %v479, inf
    %485 = vmin.xlane.f32.xlu0 %v484
    %v486 = vpop.xlane.xlu0 %485
    %v487 = vcvt.f32.s32 %v486
    %v488 = vcvt.f32.s32 %v482
    %v489 = vshll.u32 %v488, 16
    %v490 = vadd.s32 %v489, %v487
    %v491 = vmax.f32 %v453, 0.0
    %v492 = vmax.f32 %v456, 0.0
    %v493 = vrsqrt.pop %v491
    %v494 = vmul.f32 %v493, %v491
    %v495 = vmul.f32 %v494, %v493
    %v496 = vmul.f32 0.5, %v495
    %v497 = vsub.f32 1.5, %v496
    %v498 = vmul.f32 %v493, %v497
    %v499 = vmul.f32 %v491, %v498
    %vm500 = vcmp.eq.f32.partialorder %v491, inf
    %v501 = vsel %vm500, %v491, %v499
    %vm502 = vcmp.eq.f32.partialorder %v491, 0.0
    %v503 = vand.u32 %v491, 2147483648
    %v504 = vsel %vm502, %v503, %v501
    %v505 = vrsqrt.pop %v492
    %v506 = vmul.f32 %v505, %v492
    %v507 = vmul.f32 %v506, %v505
    %v508 = vmul.f32 0.5, %v507
    %v509 = vsub.f32 1.5, %v508
    %v510 = vmul.f32 %v505, %v509
    %v511 = vmul.f32 %v492, %v510
    %vm512 = vcmp.eq.f32.partialorder %v492, inf
    %v513 = vsel %vm512, %v492, %v511
    %vm514 = vcmp.eq.f32.partialorder %v492, 0.0
    %v515 = vand.u32 %v492, 2147483648
    %v516 = vsel %vm514, %v515, %v513
    %vm517 = vcmp.eq.s32.totalorder %v224, 3
    %v518 = vsel %vm517, %v504, %v443
    %v519 = vsel %vm517, %v516, %v444
    %v520 = vsel %vm517, %v475, %v445
    %v521 = vsel %vm517, %v490, %v446
    %vm522 = vcmp.eq.s32.totalorder %v224, %v475
    %vm523 = vcmp.eq.s32.totalorder %v224, %v490
    %v524 = vsel %vm522, inf, %v449
    %v525 = vsel %vm523, inf, %v450
    %v526 = vsel %vm225, %v524, inf
    %527 = vmin.xlane.f32.xlu0 %v526
    %v528 = vpop.xlane.xlu0 %527
    %v529 = vsel %vm225, %v525, inf
    %530 = vmin.xlane.f32.xlu0 %v529
    %v531 = vpop.xlane.xlu0 %530
    %vm532 = vcmp.eq.f32.partialorder %v524, %v528
    %vm533 = vcmp.eq.f32.partialorder %v525, %v531
    %v534 = vsel %vm532, %v224, 16
    %v535 = vsel %vm533, %v224, 16
    %v536 = vsel %vm225, %v534, 2147483647
    %v537 = vand.u32 %v536, 65535
    %v538 = vshra.s32 %v536, 16
    %v539 = vcvt.s32.f32 %v537
    %v540 = vcvt.s32.f32 %v538
    %541 = vmin.xlane.f32.xlu0 %v540
    %v542 = vpop.xlane.xlu0 %541
    %vm543 = vcmp.eq.f32.partialorder %v540, %v542
    %v544 = vsel %vm543, %v539, inf
    %545 = vmin.xlane.f32.xlu0 %v544
    %v546 = vpop.xlane.xlu0 %545
    %v547 = vcvt.f32.s32 %v546
    %v548 = vcvt.f32.s32 %v542
    %v549 = vshll.u32 %v548, 16
    %v550 = vadd.s32 %v549, %v547
    %v551 = vsel %vm225, %v535, 2147483647
    %v552 = vand.u32 %v551, 65535
    %v553 = vshra.s32 %v551, 16
    %v554 = vcvt.s32.f32 %v552
    %v555 = vcvt.s32.f32 %v553
    %556 = vmin.xlane.f32.xlu0 %v555
    %v557 = vpop.xlane.xlu0 %556
    %vm558 = vcmp.eq.f32.partialorder %v555, %v557
    %v559 = vsel %vm558, %v554, inf
    %560 = vmin.xlane.f32.xlu0 %v559
    %v561 = vpop.xlane.xlu0 %560
    %v562 = vcvt.f32.s32 %v561
    %v563 = vcvt.f32.s32 %v557
    %v564 = vshll.u32 %v563, 16
    %v565 = vadd.s32 %v564, %v562
    %v566 = vmax.f32 %v528, 0.0
    %v567 = vmax.f32 %v531, 0.0
    %v568 = vrsqrt.pop %v566
    %v569 = vmul.f32 %v568, %v566
    %v570 = vmul.f32 %v569, %v568
    %v571 = vmul.f32 0.5, %v570
    %v572 = vsub.f32 1.5, %v571
    %v573 = vmul.f32 %v568, %v572
    %v574 = vmul.f32 %v566, %v573
    %vm575 = vcmp.eq.f32.partialorder %v566, inf
    %v576 = vsel %vm575, %v566, %v574
    %vm577 = vcmp.eq.f32.partialorder %v566, 0.0
    %v578 = vand.u32 %v566, 2147483648
    %v579 = vsel %vm577, %v578, %v576
    %v580 = vrsqrt.pop %v567
    %v581 = vmul.f32 %v580, %v567
    %v582 = vmul.f32 %v581, %v580
    %v583 = vmul.f32 0.5, %v582
    %v584 = vsub.f32 1.5, %v583
    %v585 = vmul.f32 %v580, %v584
    %v586 = vmul.f32 %v567, %v585
    %vm587 = vcmp.eq.f32.partialorder %v567, inf
    %v588 = vsel %vm587, %v567, %v586
    %vm589 = vcmp.eq.f32.partialorder %v567, 0.0
    %v590 = vand.u32 %v567, 2147483648
    %v591 = vsel %vm589, %v590, %v588
    %vm592 = vcmp.eq.s32.totalorder %v224, 4
    %v593 = vsel %vm592, %v579, %v518
    %v594 = vsel %vm592, %v591, %v519
    %v595 = vsel %vm592, %v550, %v520
    %v596 = vsel %vm592, %v565, %v521
    %597 = vst [vmem:[#allocation10] sm:$0xff] %v593
    %598 = vst [vmem:[#allocation10 + $0x8] sm:$0xff] %v594
    %599 = vst [vmem:[#allocation11] sm:$0xff] %v595
    %600 = vst [vmem:[#allocation11 + $0x8] sm:$0xff] %v596
    // Predicated region
    $region38: #{tpu_custom_call.1} parent=1 // pred_check
      _
    $region39: #{tpu_custom_call.1} parent=1 // pred_check_branch
      %602 = sbr.rel (0) target = $region41
    $region40: #{tpu_custom_call.1} parent=1 // pred_region
      %604 = vsyncadd [#allocation4], 0
      %s605 = sshll.u32 [#allocation10], 4
      %s606 = int_to_ptr.vmem [resolvable:$true] %s605
      %s607 = sshll.u32 %s5, 4
      %s608 = int_to_ptr.hbm [resolvable:$true] %s607
      %613 = dma.vmem_to_hbm [thread:$0]  %s606, 256, %s608, [#allocation4], 128, 128, 8
    $region41: #{tpu_custom_call.1} parent=1 // pred_fallthru
      _
    // Predicated region
    $region42: #{tpu_custom_call.1} parent=1 // pred_check
      _
    $region43: #{tpu_custom_call.1} parent=1 // pred_check_branch
      %615 = sbr.rel (0) target = $region45
    $region44: #{tpu_custom_call.1} parent=1 // pred_region
      %617 = vsyncadd [#allocation12], 0
      %s618 = sshll.u32 [#allocation11], 4
      %s619 = int_to_ptr.vmem [resolvable:$true] %s618
      %s620 = sshll.u32 %s6, 4
      %s621 = int_to_ptr.hbm [resolvable:$true] %s620
      %626 = dma.vmem_to_hbm [thread:$0]  %s619, 256, %s621, [#allocation12], 128, 128, 8
    $region45: #{tpu_custom_call.1} parent=1 // pred_fallthru
      _
    // Predicated region
    $region46: #{tpu_custom_call.1} parent=1 // pred_check
      _
    $region47: #{tpu_custom_call.1} parent=1 // pred_check_branch
      %628 = sbr.rel (0) target = $region49
    $region48: #{tpu_custom_call.1} parent=1 // pred_region
      %630 = dma.done [#allocation4], 256
    $region49: #{tpu_custom_call.1} parent=1 // pred_fallthru
      _
    // Predicated region
    $region50: #{tpu_custom_call.1} parent=1 // pred_check
      _
    $region51: #{tpu_custom_call.1} parent=1 // pred_check_branch
      %632 = sbr.rel (0) target = $region53
    $region52: #{tpu_custom_call.1} parent=1 // pred_region
      %634 = dma.done [#allocation12], 256
    $region53: #{tpu_custom_call.1} parent=1 // pred_fallthru
      _
    %635 = vsyncpa [#allocation3], 1
    %636 = vsyncpa [#allocation6], 1
    %637 = vsyncpa [#allocation9], 1
    %638 = vsyncpa [#allocation4], 1
    %639 = vsyncpa [#allocation12], 1

</llo_original>
